<compile_context>
chip_gen: v5e
topology: v5e:2x2
jax: 0.10.0
libtpu: 0.0.40
codegen_flags: <defaults>
</compile_context>

<pallas_src>
import jax
import jax.numpy as jnp
from jax.experimental import pallas as pl
from jax.experimental.pallas import tpu as pltpu


def _round_up(a, b):
    return (a + b - 1) // b * b


def _sage_mean_kernel(adj_ref, x_src_ref, x_dst_ref, inv_deg_ref,
                      w_ref, b_ref, out_ref, acc_ref):
    """Grid = (dst-row tiles, src/reduction tiles).

    adj_ref    : (tm, tk)            bf16  weighted adjacency tile (dst x src)
    x_src_ref  : (tk, d_in)          bf16  source-node features for this K slab
    x_dst_ref  : (tm, d_in)          bf16  destination-node features (resident over k)
    inv_deg_ref: (tm, 1)             f32   1 / in-degree (0 for isolated nodes)
    w_ref      : (2*d_in, d_out_pad) bf16  [W_self^T ; W_neigh^T], lane-padded
    b_ref      : (1, d_out_pad)      f32   b_self + b_neigh, lane-padded
    out_ref    : (tm, d_out_pad)     f32
    acc_ref    : (tm, d_in)          f32   VMEM scratch accumulator
    """
    k = pl.program_id(1)

    @pl.when(k == 0)
    def _init():
        acc_ref[...] = jnp.zeros_like(acc_ref)

    # Weighted neighbor sum for this slab of source nodes (bf16 MXU, f32 acc).
    acc_ref[...] += jnp.dot(adj_ref[...], x_src_ref[...],
                            preferred_element_type=jnp.float32)

    @pl.when(k == pl.num_programs(1) - 1)
    def _finalize():
        h_neigh = acc_ref[...] * inv_deg_ref[...]           # mean reducer
        # Fused projection: one dot over K = 2*d_in instead of two K = d_in dots.
        h_cat = jnp.concatenate(
            [x_dst_ref[...].astype(jnp.float32), h_neigh], axis=1)
        out_ref[...] = (
            jnp.dot(h_cat.astype(w_ref.dtype), w_ref[...],
                    preferred_element_type=jnp.float32)
            + b_ref[...]
        ).astype(out_ref.dtype)


def weighted_sage_conv_mean(adj_w, deg, x, w_self, b_self, w_neigh, b_neigh,
                            *, tm=256, tk=512):
    """WeightedSAGEConv ('mean' aggregator) forward.

    adj_w  : (N, N)       float   weighted adjacency, adj_w[i, j] = weight of edge j -> i
    deg    : (N,)         float   in-degrees (number of incoming messages)
    x      : (N, D_in)    float32 node features
    w_self : (D_out, D_in), b_self : (D_out,)
    w_neigh: (D_out, D_in), b_neigh: (D_out,)
    returns: (N, D_out)   float32
    """
    n, d_in = x.shape
    d_out = w_self.shape[0]

    compute_dtype = jnp.bfloat16

    # --- tile sizes / padded extents (wrapper-side plumbing, plain JAX) -------
    tm = min(tm, _round_up(n, 8))          # dst-row tile: multiple of 8 sublanes
    tk = min(tk, _round_up(n, 128))        # src tile:     multiple of 128 lanes
    m_pad = _round_up(n, tm)
    k_pad = _round_up(n, tk)
    d_out_pad = _round_up(d_out, 128)      # lane-dense output slab

    # --- pad / cast inputs ----------------------------------------------------
    adj_p = jnp.zeros((m_pad, k_pad), compute_dtype)
    adj_p = adj_p.at[:n, :n].set(adj_w.astype(compute_dtype))
    x_src = jnp.zeros((k_pad, d_in), compute_dtype).at[:n].set(x.astype(compute_dtype))
    x_dst = jnp.zeros((m_pad, d_in), compute_dtype).at[:n].set(x.astype(compute_dtype))

    deg_f = deg.astype(jnp.float32)
    safe_deg = jnp.where(deg_f > 0, deg_f, 1.0)
    inv_deg = jnp.where(deg_f > 0, 1.0 / safe_deg, 0.0)      # isolated nodes -> 0
    inv_deg_p = jnp.zeros((m_pad, 1), jnp.float32).at[:n, 0].set(inv_deg)

    # Fused projection weight [W_self^T ; W_neigh^T] (2*D_in, D_out_pad), summed bias.
    w_stacked = jnp.concatenate([w_self.T, w_neigh.T], axis=0).astype(compute_dtype)
    w_p = jnp.zeros((2 * d_in, d_out_pad), compute_dtype).at[:, :d_out].set(w_stacked)
    b_p = jnp.zeros((1, d_out_pad), jnp.float32)
    b_p = b_p.at[0, :d_out].set((b_self + b_neigh).astype(jnp.float32))

    grid = (m_pad // tm, k_pad // tk)

    # Advisory cost estimate for XLA scheduling around the custom call.
    flops = 2 * m_pad * k_pad * d_in + 2 * m_pad * (2 * d_in) * d_out_pad
    bytes_accessed = (adj_p.size * 2 + x_src.size * 2 + x_dst.size * 2
                      + inv_deg_p.size * 4 + w_p.size * 2 + b_p.size * 4
                      + m_pad * d_out_pad * 4)

    out = pl.pallas_call(
        _sage_mean_kernel,
        out_shape=jax.ShapeDtypeStruct((m_pad, d_out_pad), jnp.float32),
        grid_spec=pltpu.PrefetchScalarGridSpec(
            num_scalar_prefetch=0,
            grid=grid,
            in_specs=[
                pl.BlockSpec((tm, tk), lambda i, k: (i, k)),              # adj tile
                pl.BlockSpec((tk, d_in), lambda i, k: (k, 0)),            # x (src slab)
                pl.BlockSpec((tm, d_in), lambda i, k: (i, 0)),            # x (dst rows)
                pl.BlockSpec((tm, 1), lambda i, k: (i, 0)),               # inv_deg
                pl.BlockSpec((2 * d_in, d_out_pad), lambda i, k: (0, 0)), # stacked W^T
                pl.BlockSpec((1, d_out_pad), lambda i, k: (0, 0)),        # summed bias
            ],
            out_specs=pl.BlockSpec((tm, d_out_pad), lambda i, k: (i, 0)),
            scratch_shapes=[pltpu.VMEM((tm, d_in), jnp.float32)],
        ),
        compiler_params=pltpu.CompilerParams(
            dimension_semantics=("parallel", "arbitrary"),
        ),
        cost_estimate=pl.CostEstimate(flops=flops, transcendentals=0,
                                      bytes_accessed=bytes_accessed),
    )(adj_p, x_src, x_dst, inv_deg_p, w_p, b_p)

    return out[:n, :d_out]


def _xavier_uniform(key, shape, gain):
    fan_out, fan_in = shape
    bound = gain * jnp.sqrt(6.0 / (fan_in + fan_out))
    return jax.random.uniform(key, shape, jnp.float32, -bound, bound)


if __name__ == "__main__":
    # Small shapes: N=256 nodes, in_feats=32, out_feats=32.
    # tm=64, tk=128 -> grid (4, 2): exercises the parallel row axis and the
    # K-accumulation (init / finalize) path even at this demo size.
    N, D_IN, D_OUT = 256, 32, 32

    key = jax.random.PRNGKey(0)
    k_feat, k_mask, k_w, k_ws, k_bs, k_wn, k_bn = jax.random.split(key, 7)

    # Node features.
    x = jax.random.normal(k_feat, (N, D_IN), jnp.float32)

    # Random graph with edge weights; self-loops added so every in-degree >= 1.
    mask = (jax.random.uniform(k_mask, (N, N)) < 0.3).astype(jnp.float32)
    mask = jnp.maximum(mask, jnp.eye(N, dtype=jnp.float32))
    edge_w = jax.random.uniform(k_w, (N, N), jnp.float32, 0.1, 1.0)
    adj_w = mask * edge_w                      # adj_w[i, j]: weight of edge j -> i
    deg = mask.sum(axis=1)                     # in-degrees (message counts)

    # Deterministic parameter init mimicking reset_parameters():
    #   xavier_uniform_(W, gain=calculate_gain('relu')=sqrt(2)); default bias init.
    gain = jnp.sqrt(2.0)
    w_self = _xavier_uniform(k_ws, (D_OUT, D_IN), gain)
    w_neigh = _xavier_uniform(k_wn, (D_OUT, D_IN), gain)
    bnd = 1.0 / jnp.sqrt(D_IN)
    b_self = jax.random.uniform(k_bs, (D_OUT,), jnp.float32, -bnd, bnd)
    b_neigh = jax.random.uniform(k_bn, (D_OUT,), jnp.float32, -bnd, bnd)

    out = weighted_sage_conv_mean(adj_w, deg, x, w_self, b_self, w_neigh, b_neigh,
                                  tm=64, tk=128)
    out = jax.block_until_ready(out)

    # Pure-JAX f32 reference of the same forward (feat_drop=0, no norm/activation).
    # The kernel streams adj/x/W in bf16 (f32 accumulation), so the tolerance is
    # looser than the original all-f32 kernel's 1e-4.
    h_neigh_ref = (adj_w @ x) / deg[:, None]
    ref = x @ w_self.T + b_self + h_neigh_ref @ w_neigh.T + b_neigh
    assert out.shape == (N, D_OUT)
    max_err = jnp.max(jnp.abs(out - ref))
    assert jnp.allclose(out, ref, atol=5e-2, rtol=5e-3), \
        f"mismatch vs reference (max abs err {max_err})"

    # TODO(synk): 'gcn'/'pool'/'lstm' aggregators and feat_drop>0 / norm / activation
    # branches are not exercised (module instantiated with aggregator_type='mean').
    print("KERNEL_OK")
</pallas_src>

<mosaic_0001>
module attributes {stable_mosaic.version = 11 : i64} {
  func.func @_sage_mean_kernel(%arg0: i32, %arg1: i32, %arg2: memref<64x128xbf16, #tpu.memory_space<vmem>>, %arg3: memref<128x32xbf16, #tpu.memory_space<vmem>>, %arg4: memref<64x32xbf16, #tpu.memory_space<vmem>>, %arg5: memref<64x1xf32, #tpu.memory_space<vmem>>, %arg6: memref<64x128xbf16, #tpu.memory_space<vmem>>, %arg7: memref<1x128xf32, #tpu.memory_space<vmem>>, %arg8: memref<64x128xf32, #tpu.memory_space<vmem>>, %arg9: memref<64x32xf32, #tpu.memory_space<vmem>>) attributes {dimension_semantics = [#tpu.dimension_semantics<parallel>, #tpu.dimension_semantics<arbitrary>], iteration_bounds = array<i64: 4, 2>, scalar_prefetch = 0 : i64, scratch_operands = 1 : i64, tpu.core_type = #tpu.core_type<tc>, window_params = [{transform_indices = @transform_0, window_bounds = array<i64: 64, 128>}, {transform_indices = @transform_1, window_bounds = array<i64: 128, 32>}, {transform_indices = @transform_2, window_bounds = array<i64: 64, 32>}, {transform_indices = @transform_3, window_bounds = array<i64: 64, 1>}, {pipeline_mode = #tpu.pipeline_mode<synchronous>, transform_indices = @transform_4, window_bounds = array<i64: 64, 128>}, {pipeline_mode = #tpu.pipeline_mode<synchronous>, transform_indices = @transform_5, window_bounds = array<i64: 1, 128>}, {transform_indices = @transform_6, window_bounds = array<i64: 64, 128>}]} {
    %c0_i32 = arith.constant 0 : i32
    %0 = arith.cmpi eq, %arg1, %c0_i32 : i32
    %1 = arith.extui %0 : i1 to i32
    %c0_i32_0 = arith.constant 0 : i32
    %2 = arith.cmpi ne, %1, %c0_i32_0 : i32
    scf.if %2 {
      %cst_9 = arith.constant 0.000000e+00 : f32
      %12 = vector.broadcast %cst_9 : f32 to vector<64x32xf32>
      %c0_10 = arith.constant 0 : index
      %c0_11 = arith.constant 0 : index
      %13 = vector.load %arg9[%c0_10, %c0_11] : memref<64x32xf32, #tpu.memory_space<vmem>>, vector<64x32xf32>
      tpu.vector_store %arg9[%c0_10, %c0_11], %12 {strides = array<i32>} : memref<64x32xf32, #tpu.memory_space<vmem>>, vector<64x32xf32>,
    } else {
    }
    %c0 = arith.constant 0 : index
    %c0_1 = arith.constant 0 : index
    %3 = vector.load %arg9[%c0, %c0_1] : memref<64x32xf32, #tpu.memory_space<vmem>>, vector<64x32xf32>
    %c0_2 = arith.constant 0 : index
    %c0_3 = arith.constant 0 : index
    %4 = vector.load %arg2[%c0_2, %c0_3] : memref<64x128xbf16, #tpu.memory_space<vmem>>, vector<64x128xbf16>
    %c0_4 = arith.constant 0 : index
    %c0_5 = arith.constant 0 : index
    %5 = vector.load %arg3[%c0_4, %c0_5] : memref<128x32xbf16, #tpu.memory_space<vmem>>, vector<128x32xbf16>
    %cst = arith.constant dense<0.000000e+00> : vector<64x32xf32>
    %6 = tpu.matmul %4, %5, %cst {dimension_numbers = #tpu.dot_dimension_numbers<[1], [0], [0], [1], [0, 0, 1, 1], [], []>} : vector<64x128xbf16>, vector<128x32xbf16>, vector<64x32xf32> -> vector<64x32xf32>
    %7 = arith.addf %3, %6 : vector<64x32xf32>
    %c0_6 = arith.constant 0 : index
    %c0_7 = arith.constant 0 : index
    %8 = vector.load %arg9[%c0_6, %c0_7] : memref<64x32xf32, #tpu.memory_space<vmem>>, vector<64x32xf32>
    tpu.vector_store %arg9[%c0_6, %c0_7], %7 {strides = array<i32>} : memref<64x32xf32, #tpu.memory_space<vmem>>, vector<64x32xf32>,
    %c1_i32 = arith.constant 1 : i32
    %9 = arith.cmpi eq, %arg1, %c1_i32 : i32
    %10 = arith.extui %9 : i1 to i32
    %c0_i32_8 = arith.constant 0 : i32
    %11 = arith.cmpi ne, %10, %c0_i32_8 : i32
    scf.if %11 {
      %c0_9 = arith.constant 0 : index
      %c0_10 = arith.constant 0 : index
      %12 = vector.load %arg9[%c0_9, %c0_10] : memref<64x32xf32, #tpu.memory_space<vmem>>, vector<64x32xf32>
      %c0_11 = arith.constant 0 : index
      %c0_12 = arith.constant 0 : index
      %13 = vector.load %arg5[%c0_11, %c0_12] : memref<64x1xf32, #tpu.memory_space<vmem>>, vector<64x1xf32>
      %14 = vector.broadcast %13 : vector<64x1xf32> to vector<64x32xf32>
      %15 = arith.mulf %12, %14 : vector<64x32xf32>
      %c0_13 = arith.constant 0 : index
      %c0_14 = arith.constant 0 : index
      %16 = vector.load %arg4[%c0_13, %c0_14] : memref<64x32xbf16, #tpu.memory_space<vmem>>, vector<64x32xbf16>
      %17 = arith.extf %16 : vector<64x32xbf16> to vector<64x32xf32>
      %18 = tpu.concatenate %17, %15 in 1 : vector<64x32xf32>, vector<64x32xf32> -> vector<64x64xf32>
      %19 = arith.truncf %18 : vector<64x64xf32> to vector<64x64xbf16>
      %c0_15 = arith.constant 0 : index
      %c0_16 = arith.constant 0 : index
      %20 = vector.load %arg6[%c0_15, %c0_16] : memref<64x128xbf16, #tpu.memory_space<vmem>>, vector<64x128xbf16>
      %cst_17 = arith.constant dense<0.000000e+00> : vector<64x128xf32>
      %21 = tpu.matmul %19, %20, %cst_17 {dimension_numbers = #tpu.dot_dimension_numbers<[1], [0], [0], [1], [0, 0, 1, 1], [], []>} : vector<64x64xbf16>, vector<64x128xbf16>, vector<64x128xf32> -> vector<64x128xf32>
      %c0_18 = arith.constant 0 : index
      %c0_19 = arith.constant 0 : index
      %22 = vector.load %arg7[%c0_18, %c0_19] : memref<1x128xf32, #tpu.memory_space<vmem>>, vector<1x128xf32>
      %23 = vector.broadcast %22 : vector<1x128xf32> to vector<64x128xf32>
      %24 = arith.addf %21, %23 : vector<64x128xf32>
      %c0_20 = arith.constant 0 : index
      %c0_21 = arith.constant 0 : index
      %25 = vector.load %arg8[%c0_20, %c0_21] : memref<64x128xf32, #tpu.memory_space<vmem>>, vector<64x128xf32>
      tpu.vector_store %arg8[%c0_20, %c0_21], %24 {strides = array<i32>} : memref<64x128xf32, #tpu.memory_space<vmem>>, vector<64x128xf32>,
    } else {
    }
    return
  }
  func.func @transform_0(%arg0: i32, %arg1: i32) -> (i32, i32) {
    %c0_i32 = arith.constant 0 : i32
    return %arg0, %arg1 : i32, i32
  }
  func.func @transform_1(%arg0: i32, %arg1: i32) -> (i32, i32) {
    %c0_i32 = arith.constant 0 : i32
    %c0_i32_0 = arith.constant 0 : i32
    return %arg1, %c0_i32 : i32, i32
  }
  func.func @transform_2(%arg0: i32, %arg1: i32) -> (i32, i32) {
    %c0_i32 = arith.constant 0 : i32
    %c0_i32_0 = arith.constant 0 : i32
    return %arg0, %c0_i32 : i32, i32
  }
  func.func @transform_3(%arg0: i32, %arg1: i32) -> (i32, i32) {
    %c0_i32 = arith.constant 0 : i32
    %c0_i32_0 = arith.constant 0 : i32
    return %arg0, %c0_i32 : i32, i32
  }
  func.func @transform_4(%arg0: i32, %arg1: i32) -> (i32, i32) {
    %c0_i32 = arith.constant 0 : i32
    %c0_i32_0 = arith.constant 0 : i32
    %c0_i32_1 = arith.constant 0 : i32
    return %c0_i32, %c0_i32_0 : i32, i32
  }
  func.func @transform_5(%arg0: i32, %arg1: i32) -> (i32, i32) {
    %c0_i32 = arith.constant 0 : i32
    %c0_i32_0 = arith.constant 0 : i32
    %c0_i32_1 = arith.constant 0 : i32
    return %c0_i32, %c0_i32_0 : i32, i32
  }
  func.func @transform_6(%arg0: i32, %arg1: i32) -> (i32, i32) {
    %c0_i32 = arith.constant 0 : i32
    %c0_i32_0 = arith.constant 0 : i32
    return %arg0, %c0_i32 : i32, i32
  }
}

</mosaic_0001>

<llo_original>
// kernel: tpu_custom_call.1
$region0: #{tpu_custom_call.1}
  #allocation0 [shape = 'u32[]', space=smem, size = 0x4, offset = 0x4, fixed_abs, tag = 'smem constant byte address 0x4 - core index']
  #allocation1 [shape = 'u32[72,128]{1,0:T(1,128)}', space=vmem, size = 0x9000, scoped, tag = 'internal scratch']
  #allocation2 [shape = 'f32[64,32]{1,0:T(8,128)}', space=vmem, size = 0x8000, scoped, tag = 'scratch operand']
  %s0 = inlined_call_operand.vmem [shape: bf16[256,256], index: 0, kind: input, shape index: {}]
  %s1 = inlined_call_operand.vmem [shape: bf16[256,32], index: 1, kind: input, shape index: {}]
  %s2 = inlined_call_operand.vmem [shape: bf16[256,32], index: 2, kind: input, shape index: {}]
  %s3 = inlined_call_operand.vmem [shape: f32[256,1], index: 3, kind: input, shape index: {}]
  %s4 = inlined_call_operand.vmem [shape: bf16[64,128], index: 4, kind: input, shape index: {}]
  %s5 = inlined_call_operand.vmem [shape: f32[1,128], index: 5, kind: input, shape index: {}]
  %s6 = inlined_call_operand.hbm [shape: f32[256,128], index: 6, kind: output, shape index: {}]
  %s7 = sld [smem:[#allocation0]]
  $region106: #{tpu_custom_call.1} parent=0
    _
  %s9 = ssub.s32 1, %s7
  %s10 = scalar_select 0, %s9, %s7
  $region1: #{tpu_custom_call.1} parent=0
    #allocation3 [shape = 'u8[32768]{0}', space=vmem, size = 0x8000, scoped, tag = 'input window, operand 0']
    #allocation4 [shape = 'u8[65536]{0}', space=vmem, size = 0x10000, scoped, tag = 'output window, operand 0']
    #allocation5 [shape = 's32[2]{0}', space=sflag, size = 0x8, scoped, tag = 'scoped memory for tpu_custom_call.1']
    %11 = vsyncpa [#allocation5], 0
    %s12 = scalar_lea.sflag [#allocation5], 1
    %13 = vsyncpa %s12, 0
    loop: start=0, step=1, limit=10
    $region2: #{tpu_custom_call.1} parent=1 // loop_pre_header
      _
    $region3: #{tpu_custom_call.1} parent=1 // loop_header
      %s15 = sphi 0, %s19
      %p16 = scmp.ge.s32.totalorder %s15, 10
      %s22 = sphi 0, %s34
      %s23 = sphi 0, %s30
      %s24 = sphi 0, %s22
      %s25 = sphi 0, %s23
      %s26 = sphi 0, %s24
      %s27 = sphi 0, %s25
      %s39 = sphi 0, %s41
      %s42 = sphi 0, %s39
      %s43 = sphi 0, %s42
      %s59 = sphi 0, %s43
      %s65 = sphi 0, %s67
      %s68 = sphi 0, %s65
      %s69 = sphi 0, %s68
      %s85 = sphi 0, %s69
      %s91 = sphi 0, %s93
      %s94 = sphi 0, %s91
      %s95 = sphi 0, %s94
      %s111 = sphi 0, %s95
      %s117 = sphi 0, %s119
      %s120 = sphi 0, %s117
      %s121 = sphi 0, %s120
      %s137 = sphi 0, %s121
      %s141 = sphi 0, %s141
      %s143 = sphi 0, %s141
      %s144 = sphi 0, %s143
      %s158 = sphi 0, %s144
      %s162 = sphi 0, %s162
      %s164 = sphi 0, %s162
      %s165 = sphi 0, %s164
      %s179 = sphi 0, %s165
      %s185 = sphi 0, %s187
      %s188 = sphi 0, %s185
      %s189 = sphi 0, %s188
      %s205 = sphi 0, %s189
    $region4: #{tpu_custom_call.1} parent=1 // loop_header_branch
      %18 = sbr.rel (%p16) target = $region8
    $region5: #{tpu_custom_call.1} parent=1 // loop_body
      %s20 = ssub.s32 %s15, 1
      %s21 = ssub.s32 %s15, 2
      %s28 = sadd.s32 1, %s23
      %p29 = scmp.ge.s32.totalorder %s28, 2
      %s30 = scalar_select %p29, 0, %s28
      %s31 = sadd.s32 1, %s22
      %s32 = scalar_select %p29, %s31, %s22
      %p33 = scmp.ge.s32.totalorder %s32, 4
      %s34 = scalar_select %p33, 0, %s32
      %s35 = ssub.s32 %s22, %s34
      %s36 = ssub.s32 %s23, %s30
      %s37 = sor.u32 %s35, %s36
      %p38 = scmp.eq.s32.totalorder %s37, 0
      %s40 = sadd.s32 %s39, 1
      %s41 = scalar_select %p38, %s39, %s40
      %p44 = pneg %p38
      %p45 = scmp.eq.s32.totalorder %s15, 7
      %p46 = por %p44, %p45
      %p47 = scmp.ne.s32.totalorder %s39, %s42
      %p48 = scmp.eq.s32.totalorder %s15, 0
      %p49 = por %p47, %p48
      %p50 = scmp.ne.s32.totalorder %s39, %s42
      %p51 = scmp.eq.s32.totalorder %s20, 7
      %p52 = por %p50, %p51
      %p53 = scmp.ne.s32.totalorder %s42, %s43
      %p54 = scmp.eq.s32.totalorder %s20, 0
      %p55 = por %p53, %p54
      %p56 = scmp.ne.s32.totalorder %s42, %s43
      %p57 = scmp.eq.s32.totalorder %s21, 7
      %p58 = por %p56, %p57
      %p60 = scmp.ne.s32.totalorder %s43, %s59
      %p61 = scmp.eq.s32.totalorder %s21, 0
      %p62 = por %p60, %p61
      %s63 = ssub.s32 %s23, %s30
      %p64 = scmp.eq.s32.totalorder %s63, 0
      %s66 = sadd.s32 %s65, 1
      %s67 = scalar_select %p64, %s65, %s66
      %p70 = pneg %p64
      %p71 = scmp.eq.s32.totalorder %s15, 7
      %p72 = por %p70, %p71
      %p73 = scmp.ne.s32.totalorder %s65, %s68
      %p74 = scmp.eq.s32.totalorder %s15, 0
      %p75 = por %p73, %p74
      %p76 = scmp.ne.s32.totalorder %s65, %s68
      %p77 = scmp.eq.s32.totalorder %s20, 7
      %p78 = por %p76, %p77
      %p79 = scmp.ne.s32.totalorder %s68, %s69
      %p80 = scmp.eq.s32.totalorder %s20, 0
      %p81 = por %p79, %p80
      %p82 = scmp.ne.s32.totalorder %s68, %s69
      %p83 = scmp.eq.s32.totalorder %s21, 7
      %p84 = por %p82, %p83
      %p86 = scmp.ne.s32.totalorder %s69, %s85
      %p87 = scmp.eq.s32.totalorder %s21, 0
      %p88 = por %p86, %p87
      %s89 = ssub.s32 %s22, %s34
      %p90 = scmp.eq.s32.totalorder %s89, 0
      %s92 = sadd.s32 %s91, 1
      %s93 = scalar_select %p90, %s91, %s92
      %p96 = pneg %p90
      %p97 = scmp.eq.s32.totalorder %s15, 7
      %p98 = por %p96, %p97
      %p99 = scmp.ne.s32.totalorder %s91, %s94
      %p100 = scmp.eq.s32.totalorder %s15, 0
      %p101 = por %p99, %p100
      %p102 = scmp.ne.s32.totalorder %s91, %s94
      %p103 = scmp.eq.s32.totalorder %s20, 7
      %p104 = por %p102, %p103
      %p105 = scmp.ne.s32.totalorder %s94, %s95
      %p106 = scmp.eq.s32.totalorder %s20, 0
      %p107 = por %p105, %p106
      %p108 = scmp.ne.s32.totalorder %s94, %s95
      %p109 = scmp.eq.s32.totalorder %s21, 7
      %p110 = por %p108, %p109
      %p112 = scmp.ne.s32.totalorder %s95, %s111
      %p113 = scmp.eq.s32.totalorder %s21, 0
      %p114 = por %p112, %p113
      %s115 = ssub.s32 %s22, %s34
      %p116 = scmp.eq.s32.totalorder %s115, 0
      %s118 = sadd.s32 %s117, 1
      %s119 = scalar_select %p116, %s117, %s118
      %p122 = pneg %p116
      %p123 = scmp.eq.s32.totalorder %s15, 7
      %p124 = por %p122, %p123
      %p125 = scmp.ne.s32.totalorder %s117, %s120
      %p126 = scmp.eq.s32.totalorder %s15, 0
      %p127 = por %p125, %p126
      %p128 = scmp.ne.s32.totalorder %s117, %s120
      %p129 = scmp.eq.s32.totalorder %s20, 7
      %p130 = por %p128, %p129
      %p131 = scmp.ne.s32.totalorder %s120, %s121
      %p132 = scmp.eq.s32.totalorder %s20, 0
      %p133 = por %p131, %p132
      %p134 = scmp.ne.s32.totalorder %s120, %s121
      %p135 = scmp.eq.s32.totalorder %s21, 7
      %p136 = por %p134, %p135
      %p138 = scmp.ne.s32.totalorder %s121, %s137
      %p139 = scmp.eq.s32.totalorder %s21, 0
      %p140 = por %p138, %p139
      %s142 = sadd.s32 %s141, 1
      %p145 = scmp.eq.s32.totalorder %s15, 7
      %p146 = scmp.ne.s32.totalorder %s141, %s143
      %p147 = scmp.eq.s32.totalorder %s15, 0
      %p148 = por %p146, %p147
      %p149 = scmp.ne.s32.totalorder %s141, %s143
      %p150 = scmp.eq.s32.totalorder %s20, 7
      %p151 = por %p149, %p150
      %p152 = scmp.ne.s32.totalorder %s143, %s144
      %p153 = scmp.eq.s32.totalorder %s20, 0
      %p154 = por %p152, %p153
      %p155 = scmp.ne.s32.totalorder %s143, %s144
      %p156 = scmp.eq.s32.totalorder %s21, 7
      %p157 = por %p155, %p156
      %p159 = scmp.ne.s32.totalorder %s144, %s158
      %p160 = scmp.eq.s32.totalorder %s21, 0
      %p161 = por %p159, %p160
      %s163 = sadd.s32 %s162, 1
      %p166 = scmp.eq.s32.totalorder %s15, 7
      %p167 = scmp.ne.s32.totalorder %s162, %s164
      %p168 = scmp.eq.s32.totalorder %s15, 0
      %p169 = por %p167, %p168
      %p170 = scmp.ne.s32.totalorder %s162, %s164
      %p171 = scmp.eq.s32.totalorder %s20, 7
      %p172 = por %p170, %p171
      %p173 = scmp.ne.s32.totalorder %s164, %s165
      %p174 = scmp.eq.s32.totalorder %s20, 0
      %p175 = por %p173, %p174
      %p176 = scmp.ne.s32.totalorder %s164, %s165
      %p177 = scmp.eq.s32.totalorder %s21, 7
      %p178 = por %p176, %p177
      %p180 = scmp.ne.s32.totalorder %s165, %s179
      %p181 = scmp.eq.s32.totalorder %s21, 0
      %p182 = por %p180, %p181
      %s183 = ssub.s32 %s22, %s34
      %p184 = scmp.eq.s32.totalorder %s183, 0
      %s186 = sadd.s32 %s185, 1
      %s187 = scalar_select %p184, %s185, %s186
      %p190 = pneg %p184
      %p191 = scmp.eq.s32.totalorder %s15, 7
      %p192 = por %p190, %p191
      %p193 = scmp.ne.s32.totalorder %s185, %s188
      %p194 = scmp.eq.s32.totalorder %s15, 0
      %p195 = por %p193, %p194
      %p196 = scmp.ne.s32.totalorder %s185, %s188
      %p197 = scmp.eq.s32.totalorder %s20, 7
      %p198 = por %p196, %p197
      %p199 = scmp.ne.s32.totalorder %s188, %s189
      %p200 = scmp.eq.s32.totalorder %s20, 0
      %p201 = por %p199, %p200
      %p202 = scmp.ne.s32.totalorder %s188, %s189
      %p203 = scmp.eq.s32.totalorder %s21, 7
      %p204 = por %p202, %p203
      %p206 = scmp.ne.s32.totalorder %s189, %s205
      %p207 = scmp.eq.s32.totalorder %s21, 0
      %p208 = por %p206, %p207
      %p209 = scmp.le.s32.totalorder 1, %s15
      %p210 = scmp.lt.s32.totalorder %s15, 9
      %p211 = pnand %p209, %p210
      %p212 = pneg %p211
      // Predicated region
      $region9: #{tpu_custom_call.1} parent=5 // pred_check
        _
      $region10: #{tpu_custom_call.1} parent=5 // pred_check_branch
        %214 = sbr.rel (%p211) target = $region12
      $region11: #{tpu_custom_call.1} parent=5 // pred_region
        %s215 = ssub.s32 %s15, 1
        // Predicated region
        $region13: #{tpu_custom_call.1} parent=11 // pred_check
          %p216 = pneg %p154
        $region14: #{tpu_custom_call.1} parent=11 // pred_check_branch
          %218 = sbr.rel (%p216) target = $region16
        $region15: #{tpu_custom_call.1} parent=11 // pred_region
          _
        $region16: #{tpu_custom_call.1} parent=11 // pred_fallthru
          _
        // Predicated region
        $region17: #{tpu_custom_call.1} parent=11 // pred_check
          %p219 = pneg %p175
        $region18: #{tpu_custom_call.1} parent=11 // pred_check_branch
          %221 = sbr.rel (%p219) target = $region20
        $region19: #{tpu_custom_call.1} parent=11 // pred_region
          _
        $region20: #{tpu_custom_call.1} parent=11 // pred_fallthru
          _
      $region12: #{tpu_custom_call.1} parent=5 // pred_fallthru
        _
      %p222 = scmp.lt.s32.totalorder %s15, 8
      // Predicated region
      $region21: #{tpu_custom_call.1} parent=5 // pred_check
        %p223 = pneg %p222
      $region22: #{tpu_custom_call.1} parent=5 // pred_check_branch
        %225 = sbr.rel (%p223) target = $region24
      $region23: #{tpu_custom_call.1} parent=5 // pred_region
        // Predicated region
        $region25: #{tpu_custom_call.1} parent=23 // pred_check
          %p226 = pneg %p49
        $region26: #{tpu_custom_call.1} parent=23 // pred_check_branch
          %228 = sbr.rel (%p226) target = $region28
        $region27: #{tpu_custom_call.1} parent=23 // pred_region
          %s229 = sand.u32 %s39, 1
          %s230 = sand.u32 %s39, 1
          %s231 = smul.addr %s230, 32
          %s232 = scalar_lea.vmem [#allocation3], %s231
          %s233 = smul.u32 8, %s22
          %s234 = smul.addr %s233, 2
          %s235 = sadd.s32 %s23, %s234
          %s236 = smul.addr %s235, 4
          %s237 = scalar_lea.vmem %s0, %s236
          // Predicated region
          $region29: #{tpu_custom_call.1} parent=27 // pred_check
            _
          $region30: #{tpu_custom_call.1} parent=27 // pred_check_branch
            %239 = sbr.rel (0) target = $region32
          $region31: #{tpu_custom_call.1} parent=27 // pred_region
            // Predicated region
            $region33: #{tpu_custom_call.1} parent=31 // pred_check
              _
            $region34: #{tpu_custom_call.1} parent=31 // pred_check_branch
              %241 = sbr.rel target = $region36
            $region35: #{tpu_custom_call.1} parent=31 // pred_region
              // Predicated region
              $region48: #{tpu_custom_call.1} parent=35 // pred_check
                _
              $region49: #{tpu_custom_call.1} parent=35 // pred_check_branch
                %271 = sbr.rel (0) target = $region51
              $region50: #{tpu_custom_call.1} parent=35 // pred_region
                loop: start=0, step=1, limit=1
                $region52: #{tpu_custom_call.1} parent=50 // loop_pre_header
                  _
                $region53: #{tpu_custom_call.1} parent=50 // loop_header
                  %s273 = sphi 0, %s277
                  %p274 = scmp.ge.s32.totalorder %s273, 1
                  %s278 = sphi %s237, %s237
                  %s279 = sphi %s232, %s232
                $region54: #{tpu_custom_call.1} parent=50 // loop_header_branch
                  %276 = sbr.rel (%p274) target = $region58
                $region55: #{tpu_custom_call.1} parent=50 // loop_body
                  _
                $region56: #{tpu_custom_call.1} parent=50 // loop_footer
                  %s277 = sadd.s32 1, %s273
                $region57: #{tpu_custom_call.1} parent=50 // loop_footer_branch
                  %272 = sbr.rel target = $region53
                $region58: #{tpu_custom_call.1} parent=50 // loop_exit
                  _
                %s281 = ssub.s32 16, 1
                loop: start=0, step=1, limit=1
                $region59: #{tpu_custom_call.1} parent=50 // loop_pre_header
                  _
                $region60: #{tpu_custom_call.1} parent=50 // loop_header
                  %s283 = sphi 0, %s287
                  %p284 = scmp.ge.s32.totalorder %s283, 1
                  %s288 = sphi %s237, %s237
                  %s289 = sphi %s232, %s232
                $region61: #{tpu_custom_call.1} parent=50 // loop_header_branch
                  %286 = sbr.rel (%p284) target = $region65
                $region62: #{tpu_custom_call.1} parent=50 // loop_body
                  %v290 = vld [vmem:[%s288] sm:%s281]
                  %291 = vst [vmem:[%s289] sm:%s281] %v290
                  %v292 = vld [vmem:[%s288 + $0x8] sm:%s281]
                  %293 = vst [vmem:[%s289 + $0x4] sm:%s281] %v292
                  %v294 = vld [vmem:[%s288 + $0x10] sm:%s281]
                  %295 = vst [vmem:[%s289 + $0x8] sm:%s281] %v294
                  %v296 = vld [vmem:[%s288 + $0x18] sm:%s281]
                  %297 = vst [vmem:[%s289 + $0xc] sm:%s281] %v296
                  %v298 = vld [vmem:[%s288 + $0x20] sm:%s281]
                  %299 = vst [vmem:[%s289 + $0x10] sm:%s281] %v298
                  %v300 = vld [vmem:[%s288 + $0x28] sm:%s281]
                  %301 = vst [vmem:[%s289 + $0x14] sm:%s281] %v300
                  %v302 = vld [vmem:[%s288 + $0x30] sm:%s281]
                  %303 = vst [vmem:[%s289 + $0x18] sm:%s281] %v302
                  %v304 = vld [vmem:[%s288 + $0x38] sm:%s281]
                  %305 = vst [vmem:[%s289 + $0x1c] sm:%s281] %v304
                $region63: #{tpu_custom_call.1} parent=50 // loop_footer
                  %s287 = sadd.s32 1, %s283
                $region64: #{tpu_custom_call.1} parent=50 // loop_footer_branch
                  %282 = sbr.rel target = $region60
                $region65: #{tpu_custom_call.1} parent=50 // loop_exit
                  _
              $region51: #{tpu_custom_call.1} parent=35 // pred_fallthru
                _
            $region36: #{tpu_custom_call.1} parent=31 // pred_fallthru
              _
            // Predicated region
            $region37: #{tpu_custom_call.1} parent=31 // pred_check
              _
            $region38: #{tpu_custom_call.1} parent=31 // pred_check_branch
              %243 = sbr.rel (0) target = $region40
            $region39: #{tpu_custom_call.1} parent=31 // pred_region
              %s245 = ssub.s32 16, 1
              loop: start=0, step=1, limit=1
              $region41: #{tpu_custom_call.1} parent=39 // loop_pre_header
                _
              $region42: #{tpu_custom_call.1} parent=39 // loop_header
                %s247 = sphi 0, %s251
                %p248 = scmp.ge.s32.totalorder %s247, 1
                %s252 = sphi %s237, %s237
                %s253 = sphi %s232, %s232
              $region43: #{tpu_custom_call.1} parent=39 // loop_header_branch
                %250 = sbr.rel (%p248) target = $region47
              $region44: #{tpu_custom_call.1} parent=39 // loop_body
                %v254 = vld [vmem:[%s252] sm:%s245]
                %255 = vst [vmem:[%s253] sm:%s245] %v254
                %v256 = vld [vmem:[%s252 + $0x8] sm:%s245]
                %257 = vst [vmem:[%s253 + $0x4] sm:%s245] %v256
                %v258 = vld [vmem:[%s252 + $0x10] sm:%s245]
                %259 = vst [vmem:[%s253 + $0x8] sm:%s245] %v258
                %v260 = vld [vmem:[%s252 + $0x18] sm:%s245]
                %261 = vst [vmem:[%s253 + $0xc] sm:%s245] %v260
                %v262 = vld [vmem:[%s252 + $0x20] sm:%s245]
                %263 = vst [vmem:[%s253 + $0x10] sm:%s245] %v262
                %v264 = vld [vmem:[%s252 + $0x28] sm:%s245]
                %265 = vst [vmem:[%s253 + $0x14] sm:%s245] %v264
                %v266 = vld [vmem:[%s252 + $0x30] sm:%s245]
                %267 = vst [vmem:[%s253 + $0x18] sm:%s245] %v266
                %v268 = vld [vmem:[%s252 + $0x38] sm:%s245]
                %269 = vst [vmem:[%s253 + $0x1c] sm:%s245] %v268
              $region45: #{tpu_custom_call.1} parent=39 // loop_footer
                %s251 = sadd.s32 1, %s247
              $region46: #{tpu_custom_call.1} parent=39 // loop_footer_branch
                %246 = sbr.rel target = $region42
              $region47: #{tpu_custom_call.1} parent=39 // loop_exit
                _
            $region40: #{tpu_custom_call.1} parent=31 // pred_fallthru
              _
          $region32: #{tpu_custom_call.1} parent=27 // pred_fallthru
            _
          %306 = vnop
        $region28: #{tpu_custom_call.1} parent=23 // pred_fallthru
          _
        // Predicated region
        $region66: #{tpu_custom_call.1} parent=23 // pred_check
          %p307 = pneg %p75
        $region67: #{tpu_custom_call.1} parent=23 // pred_check_branch
          %309 = sbr.rel (%p307) target = $region69
        $region68: #{tpu_custom_call.1} parent=23 // pred_region
          %s310 = smul.u32 16, %s23
          %p311 = scmp.lt.s32.totalorder %s310, 31
          %s312 = scalar_select %p311, %s310, 31
          %s313 = smul.addr %s312, 4
          %s314 = scalar_lea.vmem %s1, %s313
          %s315 = smul.u32 16, %s23
        $region69: #{tpu_custom_call.1} parent=23 // pred_fallthru
          _
        // Predicated region
        $region70: #{tpu_custom_call.1} parent=23 // pred_check
          %p316 = pneg %p101
        $region71: #{tpu_custom_call.1} parent=23 // pred_check_branch
          %318 = sbr.rel (%p316) target = $region73
        $region72: #{tpu_custom_call.1} parent=23 // pred_region
          %s319 = smul.u32 8, %s22
          %p320 = scmp.lt.s32.totalorder %s319, 31
          %s321 = scalar_select %p320, %s319, 31
          %s322 = smul.addr %s321, 4
          %s323 = scalar_lea.vmem %s2, %s322
          %s324 = smul.u32 8, %s22
        $region73: #{tpu_custom_call.1} parent=23 // pred_fallthru
          _
        // Predicated region
        $region74: #{tpu_custom_call.1} parent=23 // pred_check
          %p325 = pneg %p127
        $region75: #{tpu_custom_call.1} parent=23 // pred_check_branch
          %327 = sbr.rel (%p325) target = $region77
        $region76: #{tpu_custom_call.1} parent=23 // pred_region
          %s328 = smul.u32 8, %s22
          %p329 = scmp.lt.s32.totalorder %s328, 31
          %s330 = scalar_select %p329, %s328, 31
          %s331 = smul.addr %s330, 8
          %s332 = scalar_lea.vmem %s3, %s331
          %s333 = smul.u32 8, %s22
        $region77: #{tpu_custom_call.1} parent=23 // pred_fallthru
          _
      $region24: #{tpu_custom_call.1} parent=5 // pred_fallthru
        _
      %p334 = scmp.le.s32.totalorder 1, %s15
      %p335 = scmp.lt.s32.totalorder %s15, 9
      %p336 = pnand %p334, %p335
      %p337 = pneg %p336
      // Predicated region
      $region78: #{tpu_custom_call.1} parent=5 // pred_check
        _
      $region79: #{tpu_custom_call.1} parent=5 // pred_check_branch
        %339 = sbr.rel (%p336) target = $region81
      $region80: #{tpu_custom_call.1} parent=5 // pred_region
        %s340 = ssub.s32 %s15, 1
        %s341 = sand.u32 %s42, 1
        %s342 = sand.u32 %s42, 1
        %s343 = smul.addr %s342, 32
        %s344 = scalar_lea.vmem [#allocation3], %s343
        // Predicated region
        $region82: #{tpu_custom_call.1} parent=80 // pred_check
          %p345 = pneg %p55
        $region83: #{tpu_custom_call.1} parent=80 // pred_check_branch
          %347 = sbr.rel (%p345) target = $region85
        $region84: #{tpu_custom_call.1} parent=80 // pred_region
          _
        $region85: #{tpu_custom_call.1} parent=80 // pred_fallthru
          _
        %s348 = sand.u32 %s42, 1
        %s349 = sand.u32 %s42, 1
        %s350 = smul.addr %s349, 32
        %s351 = scalar_lea.vmem [#allocation3], %s350
        %p352 = pneg %p55
        %p353 = pneg %p52
        %s354 = smul.u32 16, %s25
        %p355 = scmp.lt.s32.totalorder %s354, 31
        %s356 = scalar_select %p355, %s354, 31
        %s357 = smul.addr %s356, 4
        %s358 = scalar_lea.vmem %s1, %s357
        %p359 = pneg %p81
        %p360 = pneg %p78
        %s361 = smul.u32 8, %s24
        %p362 = scmp.lt.s32.totalorder %s361, 31
        %s363 = scalar_select %p362, %s361, 31
        %s364 = smul.addr %s363, 4
        %s365 = scalar_lea.vmem %s2, %s364
        %p366 = pneg %p107
        %p367 = pneg %p104
        %s368 = smul.u32 8, %s24
        %p369 = scmp.lt.s32.totalorder %s368, 31
        %s370 = scalar_select %p369, %s368, 31
        %s371 = smul.addr %s370, 8
        %s372 = scalar_lea.vmem %s3, %s371
        %p373 = pneg %p133
        %p374 = pneg %p130
        %p375 = pneg %p154
        %p376 = pneg %p151
        %p377 = pneg %p175
        %p378 = pneg %p172
        %p379 = pneg %p201
        %p380 = pneg %p198
        %s381 = sand.u32 %s188, 1
        %s382 = scalar_lea.sflag [#allocation5], %s381
        %s383 = sand.u32 %s188, 1
        %s384 = smul.addr %s383, 64
        %s385 = scalar_lea.vmem [#allocation4], %s384
        %s386 = smul.u32 8, %s24
        %s387 = smul.u32 16, %s25
        %p388 = scmp.lt.s32.totalorder %s387, 31
        %s389 = scalar_select %p388, %s387, 31
        %s390 = smul.addr %s389, 4
        %s391 = scalar_lea.vmem %s1, %s390
        %s392 = smul.u32 16, %s25
        %s393 = smul.u32 8, %s24
        %p394 = scmp.lt.s32.totalorder %s393, 31
        %s395 = scalar_select %p394, %s393, 31
        %s396 = smul.addr %s395, 4
        %s397 = scalar_lea.vmem %s2, %s396
        %s398 = smul.u32 8, %s24
        %s399 = smul.u32 8, %s24
        %p400 = scmp.lt.s32.totalorder %s399, 31
        %s401 = scalar_select %p400, %s399, 31
        %s402 = smul.addr %s401, 8
        %s403 = scalar_lea.vmem %s3, %s402
        %s404 = smul.u32 8, %s24
        %s405 = smul.u32 8, %s24
        %p407 = scmp.eq.s32.totalorder %s25, 0
        // Predicated region
        $region86: #{tpu_custom_call.1} parent=80 // pred_check
          %p408 = pneg %p407
        $region87: #{tpu_custom_call.1} parent=80 // pred_check_branch
          %410 = sbr.rel (%p408) target = $region89
        $region88: #{tpu_custom_call.1} parent=80 // pred_region
          %vm411 = vcmask 261120
          %412 = vst.msk [vmem:[#allocation2] sm:$0xff] %vm411, 0.0
          %413 = vst.msk [vmem:[#allocation2 + $0x8] sm:$0xff] %vm411, 0.0
          %414 = vst.msk [vmem:[#allocation2 + $0x10] sm:$0xff] %vm411, 0.0
          %415 = vst.msk [vmem:[#allocation2 + $0x18] sm:$0xff] %vm411, 0.0
          %416 = vst.msk [vmem:[#allocation2 + $0x20] sm:$0xff] %vm411, 0.0
          %417 = vst.msk [vmem:[#allocation2 + $0x28] sm:$0xff] %vm411, 0.0
          %418 = vst.msk [vmem:[#allocation2 + $0x30] sm:$0xff] %vm411, 0.0
          %419 = vst.msk [vmem:[#allocation2 + $0x38] sm:$0xff] %vm411, 0.0
        $region89: #{tpu_custom_call.1} parent=80 // pred_fallthru
          _
        %v420 = vld [vmem:[#allocation2] sm:$0xff]
        %v421 = vld [vmem:[#allocation2 + $0x8] sm:$0xff]
        %v422 = vld [vmem:[#allocation2 + $0x10] sm:$0xff]
        %v423 = vld [vmem:[#allocation2 + $0x18] sm:$0xff]
        %v424 = vld [vmem:[#allocation2 + $0x20] sm:$0xff]
        %v425 = vld [vmem:[#allocation2 + $0x28] sm:$0xff]
        %v426 = vld [vmem:[#allocation2 + $0x30] sm:$0xff]
        %v427 = vld [vmem:[#allocation2 + $0x38] sm:$0xff]
        %v428 = vld [vmem:[%s344] sm:$0xf]
        %v429 = vld [vmem:[%s344 + $0x4] sm:$0xf]
        %v430 = vld [vmem:[%s344 + $0x8] sm:$0xf]
        %v431 = vld [vmem:[%s344 + $0xc] sm:$0xf]
        %v432 = vld [vmem:[%s344 + $0x10] sm:$0xf]
        %v433 = vld [vmem:[%s344 + $0x14] sm:$0xf]
        %v434 = vld [vmem:[%s344 + $0x18] sm:$0xf]
        %v435 = vld [vmem:[%s344 + $0x1c] sm:$0xf]
        %v436 = vld [vmem:[%s391] sm:$0xf]
        %v437 = vld [vmem:[%s391 + $0x4] sm:$0xf]
        %v438 = vld [vmem:[%s391 + $0x8] sm:$0xf]
        %v439 = vld [vmem:[%s391 + $0xc] sm:$0xf]
        %v440 = vld [vmem:[%s391 + $0x10] sm:$0xf]
        %v441 = vld [vmem:[%s391 + $0x14] sm:$0xf]
        %v442 = vld [vmem:[%s391 + $0x18] sm:$0xf]
        %v443 = vld [vmem:[%s391 + $0x1c] sm:$0xf]
        %v444 = vld [vmem:[%s391 + $0x20] sm:$0xf]
        %v445 = vld [vmem:[%s391 + $0x24] sm:$0xf]
        %v446 = vld [vmem:[%s391 + $0x28] sm:$0xf]
        %v447 = vld [vmem:[%s391 + $0x2c] sm:$0xf]
        %v448 = vld [vmem:[%s391 + $0x30] sm:$0xf]
        %v449 = vld [vmem:[%s391 + $0x34] sm:$0xf]
        %v450 = vld [vmem:[%s391 + $0x38] sm:$0xf]
        %v451 = vld [vmem:[%s391 + $0x3c] sm:$0xf]
        %v460 = vunpack.c.l.b16 %v428
        %v461 = vunpack.c.l.b16 %v429
        %v462 = vunpack.c.l.b16 %v430
        %v463 = vunpack.c.l.b16 %v431
        %v464 = vunpack.c.l.b16 %v432
        %v465 = vunpack.c.l.b16 %v433
        %v466 = vunpack.c.l.b16 %v434
        %v467 = vunpack.c.l.b16 %v435
        %v468 = vpack.c.b16 %v461, %v460
        %v469 = vpack.c.b16 %v463, %v462
        %v470 = vpack.c.b16 %v465, %v464
        %v471 = vpack.c.b16 %v467, %v466
        %v492 = vunpack.c.l.b16 %v436
        %v493 = vunpack.c.l.b16 %v437
        %v494 = vunpack.c.l.b16 %v438
        %v495 = vunpack.c.l.b16 %v439
        %v496 = vunpack.c.l.b16 %v440
        %v497 = vunpack.c.l.b16 %v441
        %v498 = vunpack.c.l.b16 %v442
        %v499 = vunpack.c.l.b16 %v443
        %v500 = vunpack.c.l.b16 %v444
        %v501 = vunpack.c.l.b16 %v445
        %v502 = vunpack.c.l.b16 %v446
        %v503 = vunpack.c.l.b16 %v447
        %v504 = vunpack.c.l.b16 %v448
        %v505 = vunpack.c.l.b16 %v449
        %v506 = vunpack.c.l.b16 %v450
        %v507 = vunpack.c.l.b16 %v451
        %v508 = vpack.c.b16 %v493, %v492
        %v509 = vpack.c.b16 %v495, %v494
        %v510 = vpack.c.b16 %v497, %v496
        %v511 = vpack.c.b16 %v499, %v498
        %v512 = vpack.c.b16 %v501, %v500
        %v513 = vpack.c.b16 %v503, %v502
        %v514 = vpack.c.b16 %v505, %v504
        %v515 = vpack.c.b16 %v507, %v506
        %524 = vmatpush.bf16.msra.mxu0 %v515
        %525 = vmatpush.bf16.msra.mxu0 %v514
        %526 = vmatpush.bf16.msra.mxu0 %v513
        %527 = vmatpush.bf16.msra.mxu0 %v512
        %528 = vmatpush.bf16.msra.mxu0 %v511
        %529 = vmatpush.bf16.msra.mxu0 %v510
        %530 = vmatpush.bf16.msra.mxu0 %v509
        %531 = vmatpush.bf16.msra.mxu0 %v508
        %532 = vmatmul.bf16.gmra.mxu0 %v468
        %v533 = vpop.f32.mrf.mxu0
        %v534 = vadd.f32 0.0, %v533
        %v535 = vpop.f32.mrf.mxu0
        %v536 = vadd.f32 0.0, %v535
        %537 = vmatmul.bf16.gmra.mxu0 %v469
        %v538 = vpop.f32.mrf.mxu0
        %v539 = vadd.f32 0.0, %v538
        %v540 = vpop.f32.mrf.mxu0
        %v541 = vadd.f32 0.0, %v540
        %542 = vmatmul.bf16.gmra.mxu0 %v470
        %v543 = vpop.f32.mrf.mxu0
        %v544 = vadd.f32 0.0, %v543
        %v545 = vpop.f32.mrf.mxu0
        %v546 = vadd.f32 0.0, %v545
        %547 = vmatmul.bf16.gmra.mxu0 %v471
        %v548 = vpop.f32.mrf.mxu0
        %v549 = vadd.f32 0.0, %v548
        %v550 = vpop.f32.mrf.mxu0
        %v551 = vadd.f32 0.0, %v550
        %552 = vdwg.mxu0
        %v553 = vadd.f32 %v420, %v534
        %v554 = vadd.f32 %v421, %v536
        %v555 = vadd.f32 %v422, %v539
        %v556 = vadd.f32 %v423, %v541
        %v557 = vadd.f32 %v424, %v544
        %v558 = vadd.f32 %v425, %v546
        %v559 = vadd.f32 %v426, %v549
        %v560 = vadd.f32 %v427, %v551
        %vm561 = vcmask 261120
        %562 = vst.msk [vmem:[#allocation2] sm:$0xff] %vm561, %v553
        %563 = vst.msk [vmem:[#allocation2 + $0x8] sm:$0xff] %vm561, %v554
        %564 = vst.msk [vmem:[#allocation2 + $0x10] sm:$0xff] %vm561, %v555
        %565 = vst.msk [vmem:[#allocation2 + $0x18] sm:$0xff] %vm561, %v556
        %566 = vst.msk [vmem:[#allocation2 + $0x20] sm:$0xff] %vm561, %v557
        %567 = vst.msk [vmem:[#allocation2 + $0x28] sm:$0xff] %vm561, %v558
        %568 = vst.msk [vmem:[#allocation2 + $0x30] sm:$0xff] %vm561, %v559
        %569 = vst.msk [vmem:[#allocation2 + $0x38] sm:$0xff] %vm561, %v560
        %p570 = scmp.eq.s32.totalorder %s25, 1
        // Predicated region
        $region90: #{tpu_custom_call.1} parent=80 // pred_check
          %p571 = pneg %p570
        $region91: #{tpu_custom_call.1} parent=80 // pred_check_branch
          %573 = sbr.rel (%p571) target = $region93
        $region92: #{tpu_custom_call.1} parent=80 // pred_region
          %v574 = vld [vmem:[#allocation2] sm:$0xff]
          %v575 = vld [vmem:[#allocation2 + $0x8] sm:$0xff]
          %v576 = vld [vmem:[#allocation2 + $0x10] sm:$0xff]
          %v577 = vld [vmem:[#allocation2 + $0x18] sm:$0xff]
          %v578 = vld [vmem:[#allocation2 + $0x20] sm:$0xff]
          %v579 = vld [vmem:[#allocation2 + $0x28] sm:$0xff]
          %v580 = vld [vmem:[#allocation2 + $0x30] sm:$0xff]
          %v581 = vld [vmem:[#allocation2 + $0x38] sm:$0xff]
          %v582 = vld [vmem:[%s403] sm:$0xff]
          %v583 = vld [vmem:[%s403 + $0x8] sm:$0xff]
          %v584 = vld [vmem:[%s403 + $0x10] sm:$0xff]
          %v585 = vld [vmem:[%s403 + $0x18] sm:$0xff]
          %v586 = vld [vmem:[%s403 + $0x20] sm:$0xff]
          %v587 = vld [vmem:[%s403 + $0x28] sm:$0xff]
          %v588 = vld [vmem:[%s403 + $0x30] sm:$0xff]
          %v589 = vld [vmem:[%s403 + $0x38] sm:$0xff]
          %591 = vset.pattern.permute.xlu0 0
          %592 = vperm.xlu0 %591, %v582
          %v593 = vpop.permute.xlu0 %592
          %596 = vset.pattern.permute.xlu0 0
          %597 = vperm.xlu0 %596, %v583
          %v598 = vpop.permute.xlu0 %597
          %601 = vset.pattern.permute.xlu0 0
          %602 = vperm.xlu0 %601, %v584
          %v603 = vpop.permute.xlu0 %602
          %606 = vset.pattern.permute.xlu0 0
          %607 = vperm.xlu0 %606, %v585
          %v608 = vpop.permute.xlu0 %607
          %611 = vset.pattern.permute.xlu0 0
          %612 = vperm.xlu0 %611, %v586
          %v613 = vpop.permute.xlu0 %612
          %616 = vset.pattern.permute.xlu0 0
          %617 = vperm.xlu0 %616, %v587
          %v618 = vpop.permute.xlu0 %617
          %621 = vset.pattern.permute.xlu0 0
          %622 = vperm.xlu0 %621, %v588
          %v623 = vpop.permute.xlu0 %622
          %626 = vset.pattern.permute.xlu0 0
          %627 = vperm.xlu0 %626, %v589
          %v628 = vpop.permute.xlu0 %627
          %v630 = vmul.f32 %v574, %v593
          %v631 = vmul.f32 %v575, %v598
          %v632 = vmul.f32 %v576, %v603
          %v633 = vmul.f32 %v577, %v608
          %v634 = vmul.f32 %v578, %v613
          %v635 = vmul.f32 %v579, %v618
          %v636 = vmul.f32 %v580, %v623
          %v637 = vmul.f32 %v581, %v628
          %v638 = vld [vmem:[%s397] sm:$0xf]
          %v639 = vld [vmem:[%s397 + $0x4] sm:$0xf]
          %v640 = vld [vmem:[%s397 + $0x8] sm:$0xf]
          %v641 = vld [vmem:[%s397 + $0xc] sm:$0xf]
          %v642 = vld [vmem:[%s397 + $0x10] sm:$0xf]
          %v643 = vld [vmem:[%s397 + $0x14] sm:$0xf]
          %v644 = vld [vmem:[%s397 + $0x18] sm:$0xf]
          %v645 = vld [vmem:[%s397 + $0x1c] sm:$0xf]
          %v646 = vunpack.c.l.bf16 %v638
          %v647 = vunpack.c.l.bf16 %v639
          %v648 = vunpack.c.l.bf16 %v640
          %v649 = vunpack.c.l.bf16 %v641
          %v650 = vunpack.c.l.bf16 %v642
          %v651 = vunpack.c.l.bf16 %v643
          %v652 = vunpack.c.l.bf16 %v644
          %v653 = vunpack.c.l.bf16 %v645
          %662 = vrot.lane.b32.xlu0 %v630, 32
          %v663 = vpop.permute.xlu0 %662
          %664 = vrot.lane.b32.xlu0 %v631, 32
          %v665 = vpop.permute.xlu0 %664
          %666 = vrot.lane.b32.xlu0 %v632, 32
          %v667 = vpop.permute.xlu0 %666
          %668 = vrot.lane.b32.xlu0 %v633, 32
          %v669 = vpop.permute.xlu0 %668
          %670 = vrot.lane.b32.xlu0 %v634, 32
          %v671 = vpop.permute.xlu0 %670
          %672 = vrot.lane.b32.xlu0 %v635, 32
          %v673 = vpop.permute.xlu0 %672
          %674 = vrot.lane.b32.xlu0 %v636, 32
          %v675 = vpop.permute.xlu0 %674
          %676 = vrot.lane.b32.xlu0 %v637, 32
          %v677 = vpop.permute.xlu0 %676
          %v686 = vsel %vm561, %v646, %v663
          %v687 = vsel %vm561, %v647, %v665
          %v688 = vsel %vm561, %v648, %v667
          %v689 = vsel %vm561, %v649, %v669
          %v690 = vsel %vm561, %v650, %v671
          %v691 = vsel %vm561, %v651, %v673
          %v692 = vsel %vm561, %v652, %v675
          %v693 = vsel %vm561, %v653, %v677
          %v694 = vpack.c.bf16 %v687, %v686
          %v695 = vpack.c.bf16 %v689, %v688
          %v696 = vpack.c.bf16 %v691, %v690
          %v697 = vpack.c.bf16 %v693, %v692
          %v698 = vld [vmem:[%s4] sm:$0xf]
          %v699 = vld [vmem:[%s4 + $0x4] sm:$0xf]
          %v700 = vld [vmem:[%s4 + $0x8] sm:$0xf]
          %v701 = vld [vmem:[%s4 + $0xc] sm:$0xf]
          %v702 = vld [vmem:[%s4 + $0x10] sm:$0xf]
          %v703 = vld [vmem:[%s4 + $0x14] sm:$0xf]
          %v704 = vld [vmem:[%s4 + $0x18] sm:$0xf]
          %v705 = vld [vmem:[%s4 + $0x1c] sm:$0xf]
          %v706 = vld [vmem:[%s5] sm:$0x1]
          %v708 = vperm.slane %v706, 0
          %v718 = vunpack.c.l.b16 %v698
          %v719 = vunpack.c.l.b16 %v699
          %v720 = vunpack.c.l.b16 %v700
          %v721 = vunpack.c.l.b16 %v701
          %v722 = vunpack.c.l.b16 %v702
          %v723 = vunpack.c.l.b16 %v703
          %v724 = vunpack.c.l.b16 %v704
          %v725 = vunpack.c.l.b16 %v705
          %v726 = vpack.c.b16 %v719, %v718
          %v727 = vpack.c.b16 %v721, %v720
          %v728 = vpack.c.b16 %v723, %v722
          %v729 = vpack.c.b16 %v725, %v724
          %vm734 = vcmask 523264
          %v736 = vsel %vm734, %v694, 0
          %v739 = vsel %vm734, %v695, 0
          %v742 = vsel %vm734, %v696, 0
          %v745 = vsel %vm734, %v697, 0
          %747 = vmatpush.bf16.msra.mxu0 0
          %748 = vmatpush.bf16.msra.mxu0 0
          %749 = vmatpush.bf16.msra.mxu0 0
          %750 = vmatpush.bf16.msra.mxu0 0
          %751 = vmatpush.bf16.msra.mxu0 %v729
          %752 = vmatpush.bf16.msra.mxu0 %v728
          %753 = vmatpush.bf16.msra.mxu0 %v727
          %754 = vmatpush.bf16.msra.mxu0 %v726
          %755 = vmatmul.bf16.gmra.mxu0 %v736
          %v756 = vpop.f32.mrf.mxu0
          %v757 = vadd.f32 %v708, %v756
          %v758 = vpop.f32.mrf.mxu0
          %v759 = vadd.f32 %v708, %v758
          %760 = vmatmul.bf16.gmra.mxu0 %v739
          %v761 = vpop.f32.mrf.mxu0
          %v762 = vadd.f32 %v708, %v761
          %v763 = vpop.f32.mrf.mxu0
          %v764 = vadd.f32 %v708, %v763
          %765 = vmatmul.bf16.gmra.mxu0 %v742
          %v766 = vpop.f32.mrf.mxu0
          %v767 = vadd.f32 %v708, %v766
          %v768 = vpop.f32.mrf.mxu0
          %v769 = vadd.f32 %v708, %v768
          %770 = vmatmul.bf16.gmra.mxu0 %v745
          %v771 = vpop.f32.mrf.mxu0
          %v772 = vadd.f32 %v708, %v771
          %v773 = vpop.f32.mrf.mxu0
          %v774 = vadd.f32 %v708, %v773
          %775 = vdwg.mxu0
          %776 = vst [vmem:[%s385] sm:$0xff] %v757
          %777 = vst [vmem:[%s385 + $0x8] sm:$0xff] %v759
          %778 = vst [vmem:[%s385 + $0x10] sm:$0xff] %v762
          %779 = vst [vmem:[%s385 + $0x18] sm:$0xff] %v764
          %780 = vst [vmem:[%s385 + $0x20] sm:$0xff] %v767
          %781 = vst [vmem:[%s385 + $0x28] sm:$0xff] %v769
          %782 = vst [vmem:[%s385 + $0x30] sm:$0xff] %v772
          %783 = vst [vmem:[%s385 + $0x38] sm:$0xff] %v774
        $region93: #{tpu_custom_call.1} parent=80 // pred_fallthru
          _
        %s784 = sand.u32 %s188, 1
        %s785 = scalar_lea.sflag [#allocation5], %s784
        %s786 = sand.u32 %s188, 1
        %s787 = smul.addr %s786, 64
        %s788 = scalar_lea.vmem [#allocation4], %s787
        // Predicated region
        $region94: #{tpu_custom_call.1} parent=80 // pred_check
          %p789 = pneg %p198
        $region95: #{tpu_custom_call.1} parent=80 // pred_check_branch
          %791 = sbr.rel (%p789) target = $region97
        $region96: #{tpu_custom_call.1} parent=80 // pred_region
          %s792 = smul.u32 8, %s24
          %794 = vsyncadd %s785, 0
          %s795 = smul.addr %s792, 8
          %s796 = scalar_lea.hbm %s6, %s795
          %s797 = sshll.u32 %s788, 4
          %s798 = int_to_ptr.vmem [resolvable:$true] %s797
          %s799 = sshll.u32 %s796, 4
          %s800 = int_to_ptr.hbm [resolvable:$true] %s799
          %805 = dma.vmem_to_hbm [thread:$0]  %s798, 1024, %s800, %s785, 128, 128, 8
        $region97: #{tpu_custom_call.1} parent=80 // pred_fallthru
          _
      $region81: #{tpu_custom_call.1} parent=5 // pred_fallthru
        _
      %p806 = scmp.le.s32.totalorder 2, %s15
      // Predicated region
      $region98: #{tpu_custom_call.1} parent=5 // pred_check
        %p807 = pneg %p806
      $region99: #{tpu_custom_call.1} parent=5 // pred_check_branch
        %809 = sbr.rel (%p807) target = $region101
      $region100: #{tpu_custom_call.1} parent=5 // pred_region
        %s810 = ssub.s32 %s15, 2
        // Predicated region
        $region102: #{tpu_custom_call.1} parent=100 // pred_check
          %p811 = pneg %p204
        $region103: #{tpu_custom_call.1} parent=100 // pred_check_branch
          %813 = sbr.rel (%p811) target = $region105
        $region104: #{tpu_custom_call.1} parent=100 // pred_region
          %s814 = sand.u32 %s189, 1
          %s815 = scalar_lea.sflag [#allocation5], %s814
          %s816 = sand.u32 %s189, 1
          %s817 = smul.addr %s816, 64
          %s818 = scalar_lea.vmem [#allocation4], %s817
          %820 = dma.done %s815, 1024
        $region105: #{tpu_custom_call.1} parent=100 // pred_fallthru
          _
      $region101: #{tpu_custom_call.1} parent=5 // pred_fallthru
        _
    $region6: #{tpu_custom_call.1} parent=1 // loop_footer
      %s19 = sadd.s32 1, %s15
    $region7: #{tpu_custom_call.1} parent=1 // loop_footer_branch
      %14 = sbr.rel target = $region3
    $region8: #{tpu_custom_call.1} parent=1 // loop_exit
      _
    %821 = vsyncpa [#allocation5], 1
    %s822 = scalar_lea.sflag [#allocation5], 1
    %823 = vsyncpa %s822, 1

</llo_original>
